<compile_context>
chip_gen: v7x
topology: tpu7x:2x2x1
jax: 0.10.0
libtpu: 0.0.40
codegen_flags: <defaults>
</compile_context>

<pallas_src>
import numpy as np
import jax
import jax.numpy as jnp
from jax.experimental import pallas as pl
from jax.experimental.pallas import tpu as pltpu

LANE = 128
ROW_ALIGN = 32  # multiple of the sublane tile for f32 (8), bf16 (16), fp8 (32)


def _round_up(x, m):
    return ((x + m - 1) // m) * m


def _tensorcores_per_chip():
    """Best-effort TensorCores-per-chip (2 on v7x, else 1). Never raises."""
    try:
        kind = jax.devices()[0].device_kind.lower().replace(" ", "")
        if "v7" in kind or "tpu7" in kind:
            return 2
    except Exception:
        pass
    return 1


def _make_focal_kernel(tm):
    """Build the kernel with the row-tile size closed over (trace-time const)."""

    def kernel(pred_ref, gt_ref, loss_ref, cnt_ref):
        @pl.when(pl.program_id(1) == 0)
        def _init():
            loss_ref[...] = jnp.zeros_like(loss_ref)
            cnt_ref[...] = jnp.zeros_like(cnt_ref)

        pred = pred_ref[...].astype(jnp.float32)
        gt = gt_ref[...].astype(jnp.float32)

        pred = jnp.clip(pred, 1e-15, 1.0)            # torch.clamp(pred, 1e-15, 1)
        pos = gt == 1.0                              # gt.eq(1)
        cnt = jnp.where(gt <= 1.0, 1.0, 0.0)         # pos_inds + neg_inds (disjoint)

        # pos/neg branches fused -> one log per element.
        log_arg = jnp.where(pos, pred, 1.0 - pred)   # pred        | 1 - pred
        base = 1.0 - log_arg                         # 1 - pred    | pred
        w2 = base * base                             # (1-pred)^2  | pred^2
        omg = 1.0 - gt
        omg2 = omg * omg
        neg_w = omg2 * omg2                          # (1 - gt)^4
        # * cnt zeroes gt>1 elements (sentinel padding and out-of-range gt),
        # matching the original module's 0-contribution for those elements.
        weight = jnp.where(pos, w2, w2 * neg_w) * cnt
        loss_vals = jnp.log(log_arg) * weight

        # (tm,128) -> (tm//8, 8, 128): sublane-aligned reshape, axis-0 sum is
        # pure VPU adds into the resident (8,128) accumulator blocks; the
        # cross-lane reduce happens once in the tiny JAX epilogue.
        loss_ref[...] += jnp.sum(loss_vals.reshape(tm // 8, 8, LANE), axis=0)
        cnt_ref[...] += jnp.sum(cnt.reshape(tm // 8, 8, LANE), axis=0)

    return kernel


def focal_loss(pred, gt, *, tm=2048, num_splits=None):
    """Scalar focal loss, semantics identical to PyTorch FocalLoss.forward.

    tm: row-tile size (sweepable).  num_splits: leading 'parallel' grid axis
    size; default is chip-aware (2 on v7x, 1 on single-TensorCore chips).
    """
    assert pred.shape == gt.shape
    n = int(np.prod(pred.shape))
    assert n > 0

    nsplit = int(num_splits) if num_splits is not None else _tensorcores_per_chip()
    nsplit = max(1, nsplit)

    rows0 = -(-n // LANE)                                   # cdiv(n, 128)
    tm_req = _round_up(max(int(tm), ROW_ALIGN), ROW_ALIGN)
    rows_per_split = _round_up(-(-rows0 // nsplit), ROW_ALIGN)
    tm_eff = min(tm_req, rows_per_split)
    tps = -(-rows_per_split // tm_eff)                      # tiles per split
    rows = nsplit * tps * tm_eff                            # padded row count
    pad_elems = rows * LANE - n

    pred_flat = pred.reshape(-1)
    gt_flat = gt.reshape(-1)
    if pad_elems:
        # Sentinel padding: gt=2.0 (>1) makes both the loss weight and the
        # count mask exactly 0; pred=0.0 keeps log(1-pred)=log(1.0)=0 finite.
        pred_flat = jnp.pad(pred_flat, (0, pad_elems), constant_values=0.0)
        gt_flat = jnp.pad(gt_flat, (0, pad_elems), constant_values=2.0)

    pred2 = pred_flat.reshape(rows, LANE)
    gt2 = gt_flat.reshape(rows, LANE)

    kernel = _make_focal_kernel(tm_eff)

    def in_index(p, t):
        return (p * tps + t, 0)

    def out_index(p, t):
        return (p, 0)

    n_total = rows * LANE
    bytes_in = n_total * (pred2.dtype.itemsize + gt2.dtype.itemsize)
    cost = pl.CostEstimate(
        flops=16 * n_total,
        transcendentals=n_total,
        bytes_accessed=bytes_in + 2 * nsplit * 8 * LANE * 4,
    )

    loss_parts, cnt_parts = pl.pallas_call(
        kernel,
        out_shape=(
            jax.ShapeDtypeStruct((nsplit * 8, LANE), jnp.float32),
            jax.ShapeDtypeStruct((nsplit * 8, LANE), jnp.float32),
        ),
        grid_spec=pltpu.PrefetchScalarGridSpec(
            num_scalar_prefetch=0,
            grid=(nsplit, tps),
            in_specs=[
                pl.BlockSpec((tm_eff, LANE), in_index),
                pl.BlockSpec((tm_eff, LANE), in_index),
            ],
            out_specs=[
                pl.BlockSpec((8, LANE), out_index),
                pl.BlockSpec((8, LANE), out_index),
            ],
        ),
        compiler_params=pltpu.CompilerParams(
            dimension_semantics=("parallel", "arbitrary")),
        cost_estimate=cost,
    )(pred2, gt2)

    # Tiny epilogue: cross-lane / cross-split reduce + final combine.
    # TODO(synk): the PyTorch module's isnan/isinf debug print is not replicated.
    return -jnp.sum(loss_parts) / jnp.sum(cnt_parts)


def _focal_loss_ref(pred, gt):
    # Pure-JAX reference mirroring the PyTorch code.
    pred = jnp.clip(pred.astype(jnp.float32), 1e-15, 1.0)
    gt = gt.astype(jnp.float32)
    pos_inds = (gt == 1.0).astype(jnp.float32)
    neg_inds = (gt < 1.0).astype(jnp.float32)
    neg_weights = (1.0 - gt) ** 4
    pos_loss = jnp.sum(jnp.log(pred) * (1.0 - pred) ** 2 * pos_inds)
    neg_loss = jnp.sum(jnp.log(1.0 - pred) * pred ** 2 * neg_weights * neg_inds)
    num_pos = jnp.sum(pos_inds) + jnp.sum(neg_inds)
    return -(pos_loss + neg_loss) / num_pos


def _make_inputs(key, shape, dtype):
    k_pred, k_gt, k_peak = jax.random.split(key, 3)
    pred = jax.random.uniform(k_pred, shape, jnp.float32, 0.01, 0.99)
    gt = jax.random.uniform(k_gt, shape, jnp.float32, 0.0, 0.95)
    # Plant a few exact-1.0 positives (Gaussian heatmap peaks).
    peak_mask = jax.random.uniform(k_peak, shape) > 0.97
    gt = jnp.where(peak_mask, 1.0, gt)
    return pred.astype(dtype), gt.astype(dtype)


if __name__ == "__main__":
    key = jax.random.PRNGKey(0)
    cases = [
        ((2, 4, 16, 16), jnp.float32, {}),                          # spec-sized heatmap
        ((1, 3, 13, 7), jnp.float32, {}),                           # ragged -> sentinel-pad path
        ((4, 4, 64, 32), jnp.float32, {"tm": 64, "num_splits": 2}),  # multi-tile, 2-way split
        ((2, 4, 24, 16), jnp.bfloat16, {"tm": 32}),                  # bf16 inputs end-to-end
    ]
    for idx, (shape, dtype, kw) in enumerate(cases):
        key, sub = jax.random.split(key)
        pred, gt = _make_inputs(sub, shape, dtype)
        loss = focal_loss(pred, gt, **kw)
        jax.block_until_ready(loss)
        ref = _focal_loss_ref(pred, gt)
        assert np.isfinite(float(loss)), (idx, float(loss))
        assert np.allclose(float(loss), float(ref), rtol=3e-5, atol=1e-5), \
            (idx, float(loss), float(ref))
    print("KERNEL_OK")
</pallas_src>

<mosaic_0001>
module attributes {stable_mosaic.version = 11 : i64} {
  func.func @kernel(%arg0: i32, %arg1: i32, %arg2: memref<32x128xf32, #tpu.memory_space<vmem>>, %arg3: memref<32x128xf32, #tpu.memory_space<vmem>>, %arg4: memref<8x128xf32, #tpu.memory_space<vmem>>, %arg5: memref<8x128xf32, #tpu.memory_space<vmem>>) attributes {dimension_semantics = [#tpu.dimension_semantics<parallel>, #tpu.dimension_semantics<arbitrary>], iteration_bounds = array<i64: 1, 1>, scalar_prefetch = 0 : i64, scratch_operands = 0 : i64, tpu.core_type = #tpu.core_type<tc>, window_params = [{transform_indices = @transform_0, window_bounds = array<i64: 32, 128>}, {transform_indices = @transform_1, window_bounds = array<i64: 32, 128>}, {transform_indices = @transform_2, window_bounds = array<i64: 8, 128>}, {transform_indices = @transform_3, window_bounds = array<i64: 8, 128>}]} {
    %c0_i32 = arith.constant 0 : i32
    %0 = arith.cmpi eq, %arg1, %c0_i32 : i32
    %1 = arith.extui %0 : i1 to i32
    %c0_i32_0 = arith.constant 0 : i32
    %2 = arith.cmpi ne, %1, %c0_i32_0 : i32
    scf.if %2 {
      %cst_22 = arith.constant 0.000000e+00 : f32
      %41 = vector.broadcast %cst_22 : f32 to vector<8x128xf32>
      %c0_23 = arith.constant 0 : index
      %c0_24 = arith.constant 0 : index
      %42 = vector.load %arg4[%c0_23, %c0_24] : memref<8x128xf32, #tpu.memory_space<vmem>>, vector<8x128xf32>
      tpu.vector_store %arg4[%c0_23, %c0_24], %41 {strides = array<i32>} : memref<8x128xf32, #tpu.memory_space<vmem>>, vector<8x128xf32>,
      %cst_25 = arith.constant 0.000000e+00 : f32
      %43 = vector.broadcast %cst_25 : f32 to vector<8x128xf32>
      %c0_26 = arith.constant 0 : index
      %c0_27 = arith.constant 0 : index
      %44 = vector.load %arg5[%c0_26, %c0_27] : memref<8x128xf32, #tpu.memory_space<vmem>>, vector<8x128xf32>
      tpu.vector_store %arg5[%c0_26, %c0_27], %43 {strides = array<i32>} : memref<8x128xf32, #tpu.memory_space<vmem>>, vector<8x128xf32>,
    } else {
    }
    %c0 = arith.constant 0 : index
    %c0_1 = arith.constant 0 : index
    %3 = vector.load %arg2[%c0, %c0_1] : memref<32x128xf32, #tpu.memory_space<vmem>>, vector<32x128xf32>
    %c0_2 = arith.constant 0 : index
    %c0_3 = arith.constant 0 : index
    %4 = vector.load %arg3[%c0_2, %c0_3] : memref<32x128xf32, #tpu.memory_space<vmem>>, vector<32x128xf32>
    %cst = arith.constant 1.000000e-15 : f32
    %cst_4 = arith.constant 1.000000e+00 : f32
    %5 = vector.broadcast %cst : f32 to vector<32x128xf32>
    %6 = arith.maximumf %5, %3 : vector<32x128xf32>
    %7 = vector.broadcast %cst_4 : f32 to vector<32x128xf32>
    %8 = arith.minimumf %7, %6 : vector<32x128xf32>
    %cst_5 = arith.constant 1.000000e+00 : f32
    %9 = vector.broadcast %cst_5 : f32 to vector<32x128xf32>
    %10 = arith.cmpf oeq, %4, %9 : vector<32x128xf32>
    %cst_6 = arith.constant 1.000000e+00 : f32
    %11 = vector.broadcast %cst_6 : f32 to vector<32x128xf32>
    %12 = arith.cmpf ole, %4, %11 : vector<32x128xf32>
    %cst_7 = arith.constant 1.000000e+00 : f32
    %cst_8 = arith.constant 0.000000e+00 : f32
    %13 = vector.broadcast %cst_7 : f32 to vector<32x128xf32>
    %14 = vector.broadcast %cst_8 : f32 to vector<32x128xf32>
    %15 = arith.select %12, %13, %14 : vector<32x128xi1>, vector<32x128xf32>
    %cst_9 = arith.constant 1.000000e+00 : f32
    %16 = vector.broadcast %cst_9 : f32 to vector<32x128xf32>
    %17 = arith.subf %16, %8 : vector<32x128xf32>
    %18 = arith.select %10, %8, %17 : vector<32x128xi1>, vector<32x128xf32>
    %cst_10 = arith.constant 1.000000e+00 : f32
    %19 = vector.broadcast %cst_10 : f32 to vector<32x128xf32>
    %20 = arith.subf %19, %18 : vector<32x128xf32>
    %21 = arith.mulf %20, %20 : vector<32x128xf32>
    %cst_11 = arith.constant 1.000000e+00 : f32
    %22 = vector.broadcast %cst_11 : f32 to vector<32x128xf32>
    %23 = arith.subf %22, %4 : vector<32x128xf32>
    %24 = arith.mulf %23, %23 : vector<32x128xf32>
    %25 = arith.mulf %24, %24 : vector<32x128xf32>
    %26 = arith.mulf %21, %25 : vector<32x128xf32>
    %27 = arith.select %10, %21, %26 : vector<32x128xi1>, vector<32x128xf32>
    %28 = arith.mulf %27, %15 : vector<32x128xf32>
    %29 = math.log %18 : vector<32x128xf32>
    %30 = arith.mulf %29, %28 : vector<32x128xf32>
    %c0_12 = arith.constant 0 : index
    %c0_13 = arith.constant 0 : index
    %31 = vector.load %arg4[%c0_12, %c0_13] : memref<8x128xf32, #tpu.memory_space<vmem>>, vector<8x128xf32>
    %32 = vector.shape_cast %30 : vector<32x128xf32> to vector<4x8x128xf32>
    %cst_14 = arith.constant dense<0.000000e+00> : vector<8x128xf32>
    %33 = vector.multi_reduction <add>, %32, %cst_14 [0] : vector<4x8x128xf32> to vector<8x128xf32>
    %34 = arith.addf %31, %33 : vector<8x128xf32>
    %c0_15 = arith.constant 0 : index
    %c0_16 = arith.constant 0 : index
    %35 = vector.load %arg4[%c0_15, %c0_16] : memref<8x128xf32, #tpu.memory_space<vmem>>, vector<8x128xf32>
    tpu.vector_store %arg4[%c0_15, %c0_16], %34 {strides = array<i32>} : memref<8x128xf32, #tpu.memory_space<vmem>>, vector<8x128xf32>,
    %c0_17 = arith.constant 0 : index
    %c0_18 = arith.constant 0 : index
    %36 = vector.load %arg5[%c0_17, %c0_18] : memref<8x128xf32, #tpu.memory_space<vmem>>, vector<8x128xf32>
    %37 = vector.shape_cast %15 : vector<32x128xf32> to vector<4x8x128xf32>
    %cst_19 = arith.constant dense<0.000000e+00> : vector<8x128xf32>
    %38 = vector.multi_reduction <add>, %37, %cst_19 [0] : vector<4x8x128xf32> to vector<8x128xf32>
    %39 = arith.addf %36, %38 : vector<8x128xf32>
    %c0_20 = arith.constant 0 : index
    %c0_21 = arith.constant 0 : index
    %40 = vector.load %arg5[%c0_20, %c0_21] : memref<8x128xf32, #tpu.memory_space<vmem>>, vector<8x128xf32>
    tpu.vector_store %arg5[%c0_20, %c0_21], %39 {strides = array<i32>} : memref<8x128xf32, #tpu.memory_space<vmem>>, vector<8x128xf32>,
    return
  }
  func.func @transform_0(%arg0: i32, %arg1: i32) -> (i32, i32) {
    %c1_i32 = arith.constant 1 : i32
    %0 = arith.muli %arg0, %c1_i32 : i32
    %1 = arith.addi %0, %arg1 : i32
    %c0_i32 = arith.constant 0 : i32
    %c0_i32_0 = arith.constant 0 : i32
    return %1, %c0_i32 : i32, i32
  }
  func.func @transform_1(%arg0: i32, %arg1: i32) -> (i32, i32) {
    %c1_i32 = arith.constant 1 : i32
    %0 = arith.muli %arg0, %c1_i32 : i32
    %1 = arith.addi %0, %arg1 : i32
    %c0_i32 = arith.constant 0 : i32
    %c0_i32_0 = arith.constant 0 : i32
    return %1, %c0_i32 : i32, i32
  }
  func.func @transform_2(%arg0: i32, %arg1: i32) -> (i32, i32) {
    %c0_i32 = arith.constant 0 : i32
    %c0_i32_0 = arith.constant 0 : i32
    return %arg0, %c0_i32 : i32, i32
  }
  func.func @transform_3(%arg0: i32, %arg1: i32) -> (i32, i32) {
    %c0_i32 = arith.constant 0 : i32
    %c0_i32_0 = arith.constant 0 : i32
    return %arg0, %c0_i32 : i32, i32
  }
}

</mosaic_0001>

<llo_original>
// kernel: tpu_custom_call.1
$region0: #{tpu_custom_call.1}
  #allocation0 [shape = 'u32[]', space=smem, size = 0x4, offset = 0x4, fixed_abs, tag = 'smem constant byte address 0x4 - core index']
  #allocation1 [shape = 'u32[144,128]{1,0:T(1,128)}', space=vmem, size = 0x12000, scoped, tag = 'internal scratch']
  %s0 = inlined_call_operand.hbm [shape: f32[32,128], index: 0, kind: input, shape index: {}]
  %s1 = inlined_call_operand.hbm [shape: f32[32,128], index: 1, kind: input, shape index: {}]
  %s2 = inlined_call_operand.hbm [shape: f32[8,128], index: 2, kind: output, shape index: {0}]
  %s3 = inlined_call_operand.hbm [shape: f32[8,128], index: 3, kind: output, shape index: {1}]
  %4 = xla_tuple %s2, %s3
  %s5 = sld [smem:[#allocation0]]
  $region38: #{tpu_custom_call.1} parent=0
    _
  %s7 = ssub.s32 1, %s5
  %s8 = scalar_select 0, %s7, %s5
  $region1: #{tpu_custom_call.1} parent=0
    #allocation2 [shape = 'u8[16384]{0}', space=vmem, size = 0x4000, scoped, tag = 'input window, operand 0, single buffered']
    #allocation3 [shape = 's32[1]{0}', space=sflag, size = 0x4, scoped, tag = 'scoped memory for tpu_custom_call.1']
    #allocation4 [shape = 's32[1]{0}', space=sflag, size = 0x4, scoped, tag = 'scoped memory for tpu_custom_call.1']
    #allocation5 [shape = 'u8[16384]{0}', space=vmem, size = 0x4000, scoped, tag = 'input window, operand 1, single buffered']
    #allocation6 [shape = 's32[1]{0}', space=sflag, size = 0x4, scoped, tag = 'scoped memory for tpu_custom_call.1']
    #allocation7 [shape = 'u8[4096]{0}', space=vmem, size = 0x1000, scoped, tag = 'output window, operand 0, single buffered']
    #allocation8 [shape = 'u8[4096]{0}', space=vmem, size = 0x1000, scoped, tag = 'output window, operand 1, single buffered']
    #allocation9 [shape = 's32[1]{0}', space=sflag, size = 0x4, scoped, tag = 'scoped memory for tpu_custom_call.1']
    %9 = vsyncpa [#allocation3], 0
    %10 = vsyncpa [#allocation6], 0
    %11 = vsyncpa [#allocation4], 0
    %12 = vsyncpa [#allocation9], 0
    // Predicated region
    $region2: #{tpu_custom_call.1} parent=1 // pred_check
      _
    $region3: #{tpu_custom_call.1} parent=1 // pred_check_branch
      %14 = sbr.rel (0) target = $region5
    $region4: #{tpu_custom_call.1} parent=1 // pred_region
      %s15 = sadd.s32 0, 0
      %s16 = smul.u32 4, %s15
      %s18 = ssub.s32 512, 512
      %19 = vsyncadd [#allocation3], %s18
      %s20 = smul.addr %s16, 128
      %s21 = scalar_lea.hbm %s0, %s20
      %s22 = sshll.u32 [#allocation2], 4
      %s23 = int_to_ptr.vmem [resolvable:$true] %s22
      %28 = dma.hbm_to_vmem [thread:$0]  %s21, 512, %s23, [#allocation3], 128, 128, 8
    $region5: #{tpu_custom_call.1} parent=1 // pred_fallthru
      _
    // Predicated region
    $region6: #{tpu_custom_call.1} parent=1 // pred_check
      _
    $region7: #{tpu_custom_call.1} parent=1 // pred_check_branch
      %30 = sbr.rel (0) target = $region9
    $region8: #{tpu_custom_call.1} parent=1 // pred_region
      %s31 = sadd.s32 0, 0
      %s32 = smul.u32 4, %s31
      %s34 = ssub.s32 512, 512
      %35 = vsyncadd [#allocation6], %s34
      %s36 = smul.addr %s32, 128
      %s37 = scalar_lea.hbm %s1, %s36
      %s38 = sshll.u32 [#allocation5], 4
      %s39 = int_to_ptr.vmem [resolvable:$true] %s38
      %44 = dma.hbm_to_vmem [thread:$0]  %s37, 512, %s39, [#allocation6], 128, 128, 8
    $region9: #{tpu_custom_call.1} parent=1 // pred_fallthru
      _
    // Predicated region
    $region10: #{tpu_custom_call.1} parent=1 // pred_check
      _
    $region11: #{tpu_custom_call.1} parent=1 // pred_check_branch
      %46 = sbr.rel (0) target = $region13
    $region12: #{tpu_custom_call.1} parent=1 // pred_region
      %47 = dma.done [#allocation3], 512
    $region13: #{tpu_custom_call.1} parent=1 // pred_fallthru
      _
    // Predicated region
    $region14: #{tpu_custom_call.1} parent=1 // pred_check
      _
    $region15: #{tpu_custom_call.1} parent=1 // pred_check_branch
      %49 = sbr.rel (0) target = $region17
    $region16: #{tpu_custom_call.1} parent=1 // pred_region
      %50 = dma.done [#allocation6], 512
    $region17: #{tpu_custom_call.1} parent=1 // pred_fallthru
      _
    %s51 = sadd.s32 0, 0
    %s52 = smul.u32 4, %s51
    %s53 = sadd.s32 0, 0
    %s54 = smul.u32 4, %s53
    %p55 = scmp.eq.s32.totalorder 0, 0
    // Predicated region
    $region18: #{tpu_custom_call.1} parent=1 // pred_check
      %p56 = pneg %p55
    $region19: #{tpu_custom_call.1} parent=1 // pred_check_branch
      %58 = sbr.rel (%p56) target = $region21
    $region20: #{tpu_custom_call.1} parent=1 // pred_region
      %59 = vst [vmem:[#allocation7] sm:$0xff] 0.0
      %60 = vst [vmem:[#allocation8] sm:$0xff] 0.0
    $region21: #{tpu_custom_call.1} parent=1 // pred_fallthru
      _
    %v61 = vld [vmem:[#allocation2] sm:$0xff]
    %v62 = vld [vmem:[#allocation2 + $0x8] sm:$0xff]
    %v63 = vld [vmem:[#allocation2 + $0x10] sm:$0xff]
    %v64 = vld [vmem:[#allocation2 + $0x18] sm:$0xff]
    %v65 = vld [vmem:[#allocation5] sm:$0xff]
    %v66 = vld [vmem:[#allocation5 + $0x8] sm:$0xff]
    %v67 = vld [vmem:[#allocation5 + $0x10] sm:$0xff]
    %v68 = vld [vmem:[#allocation5 + $0x18] sm:$0xff]
    %v69 = vmax.f32 %v61, 1e-15
    %v70 = vmax.f32 %v62, 1e-15
    %v71 = vmax.f32 %v63, 1e-15
    %v72 = vmax.f32 %v64, 1e-15
    %v73 = vmin.f32 %v69, 1.0
    %v74 = vmin.f32 %v70, 1.0
    %v75 = vmin.f32 %v71, 1.0
    %v76 = vmin.f32 %v72, 1.0
    %vm77 = vcmp.eq.f32.partialorder %v65, 1.0
    %vm78 = vcmp.eq.f32.partialorder %v66, 1.0
    %vm79 = vcmp.eq.f32.partialorder %v67, 1.0
    %vm80 = vcmp.eq.f32.partialorder %v68, 1.0
    %vm81 = vcmp.le.f32.partialorder %v65, 1.0
    %vm82 = vcmp.le.f32.partialorder %v66, 1.0
    %vm83 = vcmp.le.f32.partialorder %v67, 1.0
    %vm84 = vcmp.le.f32.partialorder %v68, 1.0
    %v85 = vsel %vm81, 1.0, 0.0
    %v86 = vsel %vm82, 1.0, 0.0
    %v87 = vsel %vm83, 1.0, 0.0
    %v88 = vsel %vm84, 1.0, 0.0
    %v89 = vsub.f32 1.0, %v73
    %v90 = vsub.f32 1.0, %v74
    %v91 = vsub.f32 1.0, %v75
    %v92 = vsub.f32 1.0, %v76
    %v93 = vsel %vm77, %v73, %v89
    %v94 = vsel %vm78, %v74, %v90
    %v95 = vsel %vm79, %v75, %v91
    %v96 = vsel %vm80, %v76, %v92
    %v97 = vsub.f32 1.0, %v93
    %v98 = vsub.f32 1.0, %v94
    %v99 = vsub.f32 1.0, %v95
    %v100 = vsub.f32 1.0, %v96
    %v101 = vmul.f32 %v97, %v97
    %v102 = vmul.f32 %v98, %v98
    %v103 = vmul.f32 %v99, %v99
    %v104 = vmul.f32 %v100, %v100
    %v105 = vsub.f32 1.0, %v65
    %v106 = vsub.f32 1.0, %v66
    %v107 = vsub.f32 1.0, %v67
    %v108 = vsub.f32 1.0, %v68
    %v109 = vmul.f32 %v105, %v105
    %v110 = vmul.f32 %v106, %v106
    %v111 = vmul.f32 %v107, %v107
    %v112 = vmul.f32 %v108, %v108
    %v113 = vmul.f32 %v109, %v109
    %v114 = vmul.f32 %v110, %v110
    %v115 = vmul.f32 %v111, %v111
    %v116 = vmul.f32 %v112, %v112
    %v117 = vmul.f32 %v101, %v113
    %v118 = vmul.f32 %v102, %v114
    %v119 = vmul.f32 %v103, %v115
    %v120 = vmul.f32 %v104, %v116
    %v121 = vsel %vm77, %v101, %v117
    %v122 = vsel %vm78, %v102, %v118
    %v123 = vsel %vm79, %v103, %v119
    %v124 = vsel %vm80, %v104, %v120
    %v125 = vmul.f32 %v121, %v85
    %v126 = vmul.f32 %v122, %v86
    %v127 = vmul.f32 %v123, %v87
    %v128 = vmul.f32 %v124, %v88
    %v129 = vlog2.pop %v93
    %v130 = vmul.f32 %v129, 0.6931472
    %v131 = vlog2.pop %v94
    %v132 = vmul.f32 %v131, 0.6931472
    %v133 = vlog2.pop %v95
    %v134 = vmul.f32 %v133, 0.6931472
    %v135 = vlog2.pop %v96
    %v136 = vmul.f32 %v135, 0.6931472
    %v137 = vmul.f32 %v130, %v125
    %v138 = vmul.f32 %v132, %v126
    %v139 = vmul.f32 %v134, %v127
    %v140 = vmul.f32 %v136, %v128
    %v141 = vld [vmem:[#allocation7] sm:$0xff]
    %v142 = vadd.f32 %v137, %v138
    %v143 = vadd.f32 %v142, %v139
    %v144 = vadd.f32 %v143, %v140
    %v145 = vadd.f32 %v141, %v144
    %146 = vst [vmem:[#allocation7] sm:$0xff] %v145
    %v147 = vld [vmem:[#allocation8] sm:$0xff]
    %v148 = vadd.f32 %v85, %v86
    %v149 = vadd.f32 %v148, %v87
    %v150 = vadd.f32 %v149, %v88
    %v151 = vadd.f32 %v147, %v150
    %152 = vst [vmem:[#allocation8] sm:$0xff] %v151
    // Predicated region
    $region22: #{tpu_custom_call.1} parent=1 // pred_check
      _
    $region23: #{tpu_custom_call.1} parent=1 // pred_check_branch
      %154 = sbr.rel (0) target = $region25
    $region24: #{tpu_custom_call.1} parent=1 // pred_region
      %s156 = ssub.s32 128, 128
      %157 = vsyncadd [#allocation4], %s156
      %s159 = sshll.u32 [#allocation7], 4
      %s160 = int_to_ptr.vmem [resolvable:$true] %s159
      %162 = dma.vmem_to_hbm [thread:$0]  %s160, 128, %s2, [#allocation4]
    $region25: #{tpu_custom_call.1} parent=1 // pred_fallthru
      _
    // Predicated region
    $region26: #{tpu_custom_call.1} parent=1 // pred_check
      _
    $region27: #{tpu_custom_call.1} parent=1 // pred_check_branch
      %164 = sbr.rel (0) target = $region29
    $region28: #{tpu_custom_call.1} parent=1 // pred_region
      %s166 = ssub.s32 128, 128
      %167 = vsyncadd [#allocation9], %s166
      %s169 = sshll.u32 [#allocation8], 4
      %s170 = int_to_ptr.vmem [resolvable:$true] %s169
      %172 = dma.vmem_to_hbm [thread:$0]  %s170, 128, %s3, [#allocation9]
    $region29: #{tpu_custom_call.1} parent=1 // pred_fallthru
      _
    // Predicated region
    $region30: #{tpu_custom_call.1} parent=1 // pred_check
      _
    $region31: #{tpu_custom_call.1} parent=1 // pred_check_branch
      %174 = sbr.rel (0) target = $region33
    $region32: #{tpu_custom_call.1} parent=1 // pred_region
      %175 = dma.done [#allocation4], 128
    $region33: #{tpu_custom_call.1} parent=1 // pred_fallthru
      _
    // Predicated region
    $region34: #{tpu_custom_call.1} parent=1 // pred_check
      _
    $region35: #{tpu_custom_call.1} parent=1 // pred_check_branch
      %177 = sbr.rel (0) target = $region37
    $region36: #{tpu_custom_call.1} parent=1 // pred_region
      %178 = dma.done [#allocation9], 128
    $region37: #{tpu_custom_call.1} parent=1 // pred_fallthru
      _
    %179 = vsyncpa [#allocation3], 1
    %180 = vsyncpa [#allocation6], 1
    %181 = vsyncpa [#allocation4], 1
    %182 = vsyncpa [#allocation9], 1

</llo_original>
